<compile_context>
chip_gen: v7x
topology: tpu7x:2x2x1
jax: 0.10.0
libtpu: 0.0.40
codegen_flags: <defaults>
</compile_context>

<pallas_src>
import functools

import jax
import jax.numpy as jnp
from jax.experimental import pallas as pl
from jax.experimental.pallas import tpu as pltpu


def q_kernel(s_ref, a_ref,
             ws_ref, bs_ref,
             wa_ref, ba_ref,
             wqs_ref, wqa_ref, bq_ref,
             wo_ref, bo_ref,
             out_ref):
    f32 = jnp.float32
    mm_dt = ws_ref.dtype  # matmul operand dtype (f32 or bf16)

    # _s = relu(s @ Ws + bs)            -> (TB, 512)   (bias+ReLU in f32)
    _s = jnp.dot(s_ref[...], ws_ref[...], preferred_element_type=f32)
    _s = jnp.maximum(_s + bs_ref[...], 0.0)

    # _a = relu(a @ Wa + ba)            -> (TB, 512)
    _a = jnp.dot(a_ref[...], wa_ref[...], preferred_element_type=f32)
    _a = jnp.maximum(_a + ba_ref[...], 0.0)

    # q = relu(_s @ Wq_s + _a @ Wq_a + bq)   -> (TB, 64)
    # (equivalent to relu(concat([_s,_a],1) @ Wq + bq), but with no lane-axis
    #  concatenate / relayout of a (TB,1024) intermediate)
    q = jnp.dot(_s.astype(mm_dt), wqs_ref[...], preferred_element_type=f32)
    q = q + jnp.dot(_a.astype(mm_dt), wqa_ref[...], preferred_element_type=f32)
    q = jnp.maximum(q + bq_ref[...], 0.0)

    # out = q @ Wo.T + bo  done as a VPU multiply + lane reduction  -> (TB, 1)
    o = jnp.sum(q * wo_ref[...], axis=-1, keepdims=True) + bo_ref[...]
    out_ref[...] = o.astype(out_ref.dtype)


def prepare_params(params, *, use_bf16=False):
    """One-time preprocessing: transpose to [in,out], split fc_Q, reshape
    biases to rows, optional bf16 cast of MXU operands. Call once at init,
    NOT per forward."""
    mm = jnp.bfloat16 if use_bf16 else jnp.float32
    wq_t = params["fc_Q_w"].T  # (1024, 64)
    return dict(
        ws=params["fc_s_w"].T.astype(mm),                 # (in, 512)
        bs=params["fc_s_b"][None, :].astype(jnp.float32),  # (1, 512)
        wa=params["fc_a_w"].T.astype(mm),                 # (act, 512)
        ba=params["fc_a_b"][None, :].astype(jnp.float32),  # (1, 512)
        wqs=wq_t[:512].astype(mm),                        # (512, 64)
        wqa=wq_t[512:].astype(mm),                        # (512, 64)
        bq=params["fc_Q_b"][None, :].astype(jnp.float32),  # (1, 64)
        wo=params["out_w"].astype(jnp.float32),            # (1, 64) row
        bo=params["out_b"][None, :].astype(jnp.float32),   # (1, 1)
    )


@functools.partial(jax.jit, static_argnames=("tb",))
def q_forward(s, a, pp, *, tb=512):
    """Pallas-backed Q(s, a). `pp` must come from prepare_params()."""
    B, din = s.shape
    dact = a.shape[1]
    mm = pp["ws"].dtype
    s = s.astype(mm)
    a = a.astype(mm)

    # Batch tile: whole batch if small, otherwise tb rows (tb multiple of 8).
    TB = B if B <= tb else tb
    grid = (pl.cdiv(B, TB),)

    def row_spec(block):        # batch-tiled operands
        return pl.BlockSpec(block, lambda i: (i, 0))

    def full_spec(arr):         # weights/biases: constant index -> VMEM-resident
        return pl.BlockSpec(arr.shape, lambda i: (0, 0))

    return pl.pallas_call(
        q_kernel,
        out_shape=jax.ShapeDtypeStruct((B, 1), jnp.float32),
        grid=grid,
        in_specs=[
            row_spec((TB, din)),
            row_spec((TB, dact)),
            full_spec(pp["ws"]), full_spec(pp["bs"]),
            full_spec(pp["wa"]), full_spec(pp["ba"]),
            full_spec(pp["wqs"]), full_spec(pp["wqa"]), full_spec(pp["bq"]),
            full_spec(pp["wo"]), full_spec(pp["bo"]),
        ],
        out_specs=row_spec((TB, 1)),
        compiler_params=pltpu.CompilerParams(
            dimension_semantics=("parallel",)),
    )(s, a, pp["ws"], pp["bs"], pp["wa"], pp["ba"],
      pp["wqs"], pp["wqa"], pp["bq"], pp["wo"], pp["bo"])


def q_forward_ref(s, a, params):
    """Pure-JAX reference matching the PyTorch forward."""
    _s = jax.nn.relu(s @ params["fc_s_w"].T + params["fc_s_b"])
    _a = jax.nn.relu(a @ params["fc_a_w"].T + params["fc_a_b"])
    sa = jnp.concatenate([_s, _a], axis=1)
    q = jax.nn.relu(sa @ params["fc_Q_w"].T + params["fc_Q_b"])
    return q @ params["out_w"].T + params["out_b"]


def init_params(key, input_dim, output_dim):
    """Deterministic init mirroring nn.Linear default (uniform +-1/sqrt(fan_in))."""
    def linear(k, fan_in, fan_out):
        kw, kb = jax.random.split(k)
        bound = 1.0 / jnp.sqrt(fan_in)
        w = jax.random.uniform(kw, (fan_out, fan_in), jnp.float32, -bound, bound)
        b = jax.random.uniform(kb, (fan_out,), jnp.float32, -bound, bound)
        return w, b

    keys = jax.random.split(key, 4)
    fc_s_w, fc_s_b = linear(keys[0], input_dim, 512)
    fc_a_w, fc_a_b = linear(keys[1], output_dim, 512)
    fc_Q_w, fc_Q_b = linear(keys[2], 1024, 64)
    out_w, out_b = linear(keys[3], 64, 1)
    # fc_a1 / fc_Q1 are unused in forward; omitted.
    return dict(fc_s_w=fc_s_w, fc_s_b=fc_s_b,
                fc_a_w=fc_a_w, fc_a_b=fc_a_b,
                fc_Q_w=fc_Q_w, fc_Q_b=fc_Q_b,
                out_w=out_w, out_b=out_b)


if __name__ == "__main__":
    key = jax.random.PRNGKey(0)
    k_s, k_a, k_p, k_s2, k_a2 = jax.random.split(key, 5)

    input_dim = 32   # state dim
    output_dim = 8   # action dim
    params = init_params(k_p, input_dim, output_dim)

    # --- small-batch, f32, single tile (grid=(1,)) ---
    batch = 8
    s = jax.random.normal(k_s, (batch, input_dim), jnp.float32)
    a = jax.random.normal(k_a, (batch, output_dim), jnp.float32)

    pp_f32 = prepare_params(params, use_bf16=False)
    out = jax.block_until_ready(q_forward(s, a, pp_f32))
    ref = q_forward_ref(s, a, params)
    assert out.shape == (batch, 1)
    assert jnp.allclose(out, ref, atol=1e-4, rtol=1e-4), (out, ref)

    # --- larger batch, bf16 MXU operands, tiled grid (2 steps, parallel) ---
    batch2 = 64
    s2 = jax.random.normal(k_s2, (batch2, input_dim), jnp.float32)
    a2 = jax.random.normal(k_a2, (batch2, output_dim), jnp.float32)

    pp_bf16 = prepare_params(params, use_bf16=True)
    out2 = jax.block_until_ready(q_forward(s2, a2, pp_bf16, tb=32))
    ref2 = q_forward_ref(s2, a2, params)
    assert out2.shape == (batch2, 1)
    assert bool(jnp.all(jnp.isfinite(out2)))
    assert jnp.allclose(out2, ref2, atol=5e-2, rtol=5e-2), (out2, ref2)

    print("KERNEL_OK")
</pallas_src>

<mosaic_0001>
module attributes {stable_mosaic.version = 11 : i64} {
  func.func @q_kernel(%arg0: i32, %arg1: memref<8x32xf32, #tpu.memory_space<vmem>>, %arg2: memref<8x8xf32, #tpu.memory_space<vmem>>, %arg3: memref<32x512xf32, #tpu.memory_space<vmem>>, %arg4: memref<1x512xf32, #tpu.memory_space<vmem>>, %arg5: memref<8x512xf32, #tpu.memory_space<vmem>>, %arg6: memref<1x512xf32, #tpu.memory_space<vmem>>, %arg7: memref<512x64xf32, #tpu.memory_space<vmem>>, %arg8: memref<512x64xf32, #tpu.memory_space<vmem>>, %arg9: memref<1x64xf32, #tpu.memory_space<vmem>>, %arg10: memref<1x64xf32, #tpu.memory_space<vmem>>, %arg11: memref<1x1xf32, #tpu.memory_space<vmem>>, %arg12: memref<8x1xf32, #tpu.memory_space<vmem>>) attributes {dimension_semantics = [#tpu.dimension_semantics<parallel>], iteration_bounds = array<i64: 1>, scalar_prefetch = 0 : i64, scratch_operands = 0 : i64, tpu.core_type = #tpu.core_type<tc>, window_params = [{transform_indices = @transform_0, window_bounds = array<i64: 8, 32>}, {transform_indices = @transform_1, window_bounds = array<i64: 8, 8>}, {pipeline_mode = #tpu.pipeline_mode<synchronous>, transform_indices = @transform_2, window_bounds = array<i64: 32, 512>}, {pipeline_mode = #tpu.pipeline_mode<synchronous>, transform_indices = @transform_3, window_bounds = array<i64: 1, 512>}, {pipeline_mode = #tpu.pipeline_mode<synchronous>, transform_indices = @transform_4, window_bounds = array<i64: 8, 512>}, {pipeline_mode = #tpu.pipeline_mode<synchronous>, transform_indices = @transform_5, window_bounds = array<i64: 1, 512>}, {pipeline_mode = #tpu.pipeline_mode<synchronous>, transform_indices = @transform_6, window_bounds = array<i64: 512, 64>}, {pipeline_mode = #tpu.pipeline_mode<synchronous>, transform_indices = @transform_7, window_bounds = array<i64: 512, 64>}, {pipeline_mode = #tpu.pipeline_mode<synchronous>, transform_indices = @transform_8, window_bounds = array<i64: 1, 64>}, {pipeline_mode = #tpu.pipeline_mode<synchronous>, transform_indices = @transform_9, window_bounds = array<i64: 1, 64>}, {pipeline_mode = #tpu.pipeline_mode<synchronous>, transform_indices = @transform_10, window_bounds = array<i64: 1, 1>}, {transform_indices = @transform_11, window_bounds = array<i64: 8, 1>}]} {
    %c0 = arith.constant 0 : index
    %c0_0 = arith.constant 0 : index
    %0 = vector.load %arg1[%c0, %c0_0] : memref<8x32xf32, #tpu.memory_space<vmem>>, vector<8x32xf32>
    %c0_1 = arith.constant 0 : index
    %c0_2 = arith.constant 0 : index
    %1 = vector.load %arg3[%c0_1, %c0_2] : memref<32x512xf32, #tpu.memory_space<vmem>>, vector<32x512xf32>
    %cst = arith.constant dense<0.000000e+00> : vector<8x512xf32>
    %2 = tpu.matmul %0, %1, %cst {dimension_numbers = #tpu.dot_dimension_numbers<[1], [0], [0], [1], [0, 0, 1, 1], [], []>} : vector<8x32xf32>, vector<32x512xf32>, vector<8x512xf32> -> vector<8x512xf32>
    %c0_3 = arith.constant 0 : index
    %c0_4 = arith.constant 0 : index
    %3 = vector.load %arg4[%c0_3, %c0_4] : memref<1x512xf32, #tpu.memory_space<vmem>>, vector<1x512xf32>
    %4 = vector.broadcast %3 : vector<1x512xf32> to vector<8x512xf32>
    %5 = arith.addf %2, %4 : vector<8x512xf32>
    %cst_5 = arith.constant 0.000000e+00 : f32
    %6 = vector.broadcast %cst_5 : f32 to vector<8x512xf32>
    %7 = arith.maximumf %5, %6 : vector<8x512xf32>
    %c0_6 = arith.constant 0 : index
    %c0_7 = arith.constant 0 : index
    %8 = vector.load %arg2[%c0_6, %c0_7] : memref<8x8xf32, #tpu.memory_space<vmem>>, vector<8x8xf32>
    %c0_8 = arith.constant 0 : index
    %c0_9 = arith.constant 0 : index
    %9 = vector.load %arg5[%c0_8, %c0_9] : memref<8x512xf32, #tpu.memory_space<vmem>>, vector<8x512xf32>
    %cst_10 = arith.constant dense<0.000000e+00> : vector<8x512xf32>
    %10 = tpu.matmul %8, %9, %cst_10 {dimension_numbers = #tpu.dot_dimension_numbers<[1], [0], [0], [1], [0, 0, 1, 1], [], []>} : vector<8x8xf32>, vector<8x512xf32>, vector<8x512xf32> -> vector<8x512xf32>
    %c0_11 = arith.constant 0 : index
    %c0_12 = arith.constant 0 : index
    %11 = vector.load %arg6[%c0_11, %c0_12] : memref<1x512xf32, #tpu.memory_space<vmem>>, vector<1x512xf32>
    %12 = vector.broadcast %11 : vector<1x512xf32> to vector<8x512xf32>
    %13 = arith.addf %10, %12 : vector<8x512xf32>
    %cst_13 = arith.constant 0.000000e+00 : f32
    %14 = vector.broadcast %cst_13 : f32 to vector<8x512xf32>
    %15 = arith.maximumf %13, %14 : vector<8x512xf32>
    %c0_14 = arith.constant 0 : index
    %c0_15 = arith.constant 0 : index
    %16 = vector.load %arg7[%c0_14, %c0_15] : memref<512x64xf32, #tpu.memory_space<vmem>>, vector<512x64xf32>
    %cst_16 = arith.constant dense<0.000000e+00> : vector<8x64xf32>
    %17 = tpu.matmul %7, %16, %cst_16 {dimension_numbers = #tpu.dot_dimension_numbers<[1], [0], [0], [1], [0, 0, 1, 1], [], []>} : vector<8x512xf32>, vector<512x64xf32>, vector<8x64xf32> -> vector<8x64xf32>
    %c0_17 = arith.constant 0 : index
    %c0_18 = arith.constant 0 : index
    %18 = vector.load %arg8[%c0_17, %c0_18] : memref<512x64xf32, #tpu.memory_space<vmem>>, vector<512x64xf32>
    %cst_19 = arith.constant dense<0.000000e+00> : vector<8x64xf32>
    %19 = tpu.matmul %15, %18, %cst_19 {dimension_numbers = #tpu.dot_dimension_numbers<[1], [0], [0], [1], [0, 0, 1, 1], [], []>} : vector<8x512xf32>, vector<512x64xf32>, vector<8x64xf32> -> vector<8x64xf32>
    %20 = arith.addf %17, %19 : vector<8x64xf32>
    %c0_20 = arith.constant 0 : index
    %c0_21 = arith.constant 0 : index
    %21 = vector.load %arg9[%c0_20, %c0_21] : memref<1x64xf32, #tpu.memory_space<vmem>>, vector<1x64xf32>
    %22 = vector.broadcast %21 : vector<1x64xf32> to vector<8x64xf32>
    %23 = arith.addf %20, %22 : vector<8x64xf32>
    %cst_22 = arith.constant 0.000000e+00 : f32
    %24 = vector.broadcast %cst_22 : f32 to vector<8x64xf32>
    %25 = arith.maximumf %23, %24 : vector<8x64xf32>
    %c0_23 = arith.constant 0 : index
    %c0_24 = arith.constant 0 : index
    %26 = vector.load %arg10[%c0_23, %c0_24] : memref<1x64xf32, #tpu.memory_space<vmem>>, vector<1x64xf32>
    %27 = vector.broadcast %26 : vector<1x64xf32> to vector<8x64xf32>
    %28 = arith.mulf %25, %27 : vector<8x64xf32>
    %cst_25 = arith.constant dense<0.000000e+00> : vector<8xf32>
    %29 = vector.multi_reduction <add>, %28, %cst_25 [1] : vector<8x64xf32> to vector<8xf32>
    %30 = vector.shape_cast %29 : vector<8xf32> to vector<8x1xf32>
    %c0_26 = arith.constant 0 : index
    %c0_27 = arith.constant 0 : index
    %31 = vector.load %arg11[%c0_26, %c0_27] : memref<1x1xf32, #tpu.memory_space<vmem>>, vector<1x1xf32>
    %32 = vector.broadcast %31 : vector<1x1xf32> to vector<8x1xf32>
    %33 = arith.addf %30, %32 : vector<8x1xf32>
    %c0_28 = arith.constant 0 : index
    %c0_29 = arith.constant 0 : index
    %34 = vector.load %arg12[%c0_28, %c0_29] : memref<8x1xf32, #tpu.memory_space<vmem>>, vector<8x1xf32>
    tpu.vector_store %arg12[%c0_28, %c0_29], %33 {strides = array<i32>} : memref<8x1xf32, #tpu.memory_space<vmem>>, vector<8x1xf32>,
    return
  }
  func.func @transform_0(%arg0: i32) -> (i32, i32) {
    %c0_i32 = arith.constant 0 : i32
    %c0_i32_0 = arith.constant 0 : i32
    return %arg0, %c0_i32 : i32, i32
  }
  func.func @transform_1(%arg0: i32) -> (i32, i32) {
    %c0_i32 = arith.constant 0 : i32
    %c0_i32_0 = arith.constant 0 : i32
    return %arg0, %c0_i32 : i32, i32
  }
  func.func @transform_2(%arg0: i32) -> (i32, i32) {
    %c0_i32 = arith.constant 0 : i32
    %c0_i32_0 = arith.constant 0 : i32
    %c0_i32_1 = arith.constant 0 : i32
    return %c0_i32, %c0_i32_0 : i32, i32
  }
  func.func @transform_3(%arg0: i32) -> (i32, i32) {
    %c0_i32 = arith.constant 0 : i32
    %c0_i32_0 = arith.constant 0 : i32
    %c0_i32_1 = arith.constant 0 : i32
    return %c0_i32, %c0_i32_0 : i32, i32
  }
  func.func @transform_4(%arg0: i32) -> (i32, i32) {
    %c0_i32 = arith.constant 0 : i32
    %c0_i32_0 = arith.constant 0 : i32
    %c0_i32_1 = arith.constant 0 : i32
    return %c0_i32, %c0_i32_0 : i32, i32
  }
  func.func @transform_5(%arg0: i32) -> (i32, i32) {
    %c0_i32 = arith.constant 0 : i32
    %c0_i32_0 = arith.constant 0 : i32
    %c0_i32_1 = arith.constant 0 : i32
    return %c0_i32, %c0_i32_0 : i32, i32
  }
  func.func @transform_6(%arg0: i32) -> (i32, i32) {
    %c0_i32 = arith.constant 0 : i32
    %c0_i32_0 = arith.constant 0 : i32
    %c0_i32_1 = arith.constant 0 : i32
    return %c0_i32, %c0_i32_0 : i32, i32
  }
  func.func @transform_7(%arg0: i32) -> (i32, i32) {
    %c0_i32 = arith.constant 0 : i32
    %c0_i32_0 = arith.constant 0 : i32
    %c0_i32_1 = arith.constant 0 : i32
    return %c0_i32, %c0_i32_0 : i32, i32
  }
  func.func @transform_8(%arg0: i32) -> (i32, i32) {
    %c0_i32 = arith.constant 0 : i32
    %c0_i32_0 = arith.constant 0 : i32
    %c0_i32_1 = arith.constant 0 : i32
    return %c0_i32, %c0_i32_0 : i32, i32
  }
  func.func @transform_9(%arg0: i32) -> (i32, i32) {
    %c0_i32 = arith.constant 0 : i32
    %c0_i32_0 = arith.constant 0 : i32
    %c0_i32_1 = arith.constant 0 : i32
    return %c0_i32, %c0_i32_0 : i32, i32
  }
  func.func @transform_10(%arg0: i32) -> (i32, i32) {
    %c0_i32 = arith.constant 0 : i32
    %c0_i32_0 = arith.constant 0 : i32
    %c0_i32_1 = arith.constant 0 : i32
    return %c0_i32, %c0_i32_0 : i32, i32
  }
  func.func @transform_11(%arg0: i32) -> (i32, i32) {
    %c0_i32 = arith.constant 0 : i32
    %c0_i32_0 = arith.constant 0 : i32
    return %arg0, %c0_i32 : i32, i32
  }
}

</mosaic_0001>

<llo_original>
// kernel: q_forward.1
$region0: #{q_forward.1}
  #allocation0 [shape = 'u32[]', space=smem, size = 0x4, offset = 0x4, fixed_abs, tag = 'smem constant byte address 0x4 - core index']
  #allocation1 [shape = 'u32[144,128]{1,0:T(1,128)}', space=vmem, size = 0x12000, scoped, tag = 'internal scratch']
  #allocation2 [shape = 'f32[1,1]{1,0:T(1,128)S(1)}', space=vmem, size = 0x200, scoped, tag = 'scoped memory for q_forward.1']
  %s0 = inlined_call_operand.vmem [shape: f32[8,32], index: 0, kind: input, shape index: {}]
  %s1 = inlined_call_operand.vmem [shape: f32[8,8], index: 1, kind: input, shape index: {}]
  %s2 = inlined_call_operand.vmem [shape: f32[32,512], index: 2, kind: input, shape index: {}]
  %s3 = inlined_call_operand.vmem [shape: f32[1,512], index: 3, kind: input, shape index: {}]
  %s4 = inlined_call_operand.vmem [shape: f32[8,512], index: 4, kind: input, shape index: {}]
  %s5 = inlined_call_operand.vmem [shape: f32[1,512], index: 5, kind: input, shape index: {}]
  %s6 = inlined_call_operand.vmem [shape: f32[512,64], index: 6, kind: input, shape index: {}]
  %s7 = inlined_call_operand.vmem [shape: f32[512,64], index: 7, kind: input, shape index: {}]
  %s8 = inlined_call_operand.vmem [shape: f32[1,64], index: 8, kind: input, shape index: {}]
  %s9 = inlined_call_operand.vmem [shape: f32[1,64], index: 9, kind: input, shape index: {}]
  %s10 = inlined_call_operand.<no memory space> [shape: f32[1,1], index: 10, kind: input, shape index: {}]
  %s11 = inlined_call_operand.vmem [shape: f32[8,1], index: 11, kind: output, shape index: {}]
  %s12 = sld [smem:[#allocation0]]
  $region54: #{q_forward.1} parent=0
    _
  %s14 = ssub.s32 1, %s12
  %s15 = scalar_select 0, %s14, %s12
  %v16 = vstv %s10
  %17 = vst [vmem:[#allocation2] sm:$0x1] %v16
  // Predicated region
  $region2: #{q_forward.1} parent=0 // pred_check
    _
  $region3: #{q_forward.1} parent=0 // pred_check_branch
    %19 = sbr.rel (0) target = $region5
  $region4: #{q_forward.1} parent=0 // pred_region
    _
  $region5: #{q_forward.1} parent=0 // pred_fallthru
    _
  // Predicated region
  $region6: #{q_forward.1} parent=0 // pred_check
    _
  $region7: #{q_forward.1} parent=0 // pred_check_branch
    %21 = sbr.rel (0) target = $region9
  $region8: #{q_forward.1} parent=0 // pred_region
    _
  $region9: #{q_forward.1} parent=0 // pred_fallthru
    _
  // Predicated region
  $region10: #{q_forward.1} parent=0 // pred_check
    _
  $region11: #{q_forward.1} parent=0 // pred_check_branch
    %23 = sbr.rel (0) target = $region13
  $region12: #{q_forward.1} parent=0 // pred_region
    _
  $region13: #{q_forward.1} parent=0 // pred_fallthru
    _
  // Predicated region
  $region14: #{q_forward.1} parent=0 // pred_check
    _
  $region15: #{q_forward.1} parent=0 // pred_check_branch
    %25 = sbr.rel (0) target = $region17
  $region16: #{q_forward.1} parent=0 // pred_region
    _
  $region17: #{q_forward.1} parent=0 // pred_fallthru
    _
  // Predicated region
  $region18: #{q_forward.1} parent=0 // pred_check
    _
  $region19: #{q_forward.1} parent=0 // pred_check_branch
    %27 = sbr.rel (0) target = $region21
  $region20: #{q_forward.1} parent=0 // pred_region
    _
  $region21: #{q_forward.1} parent=0 // pred_fallthru
    _
  // Predicated region
  $region22: #{q_forward.1} parent=0 // pred_check
    _
  $region23: #{q_forward.1} parent=0 // pred_check_branch
    %29 = sbr.rel (0) target = $region25
  $region24: #{q_forward.1} parent=0 // pred_region
    _
  $region25: #{q_forward.1} parent=0 // pred_fallthru
    _
  // Predicated region
  $region26: #{q_forward.1} parent=0 // pred_check
    _
  $region27: #{q_forward.1} parent=0 // pred_check_branch
    %31 = sbr.rel (0) target = $region29
  $region28: #{q_forward.1} parent=0 // pred_region
    _
  $region29: #{q_forward.1} parent=0 // pred_fallthru
    _
  // Predicated region
  $region30: #{q_forward.1} parent=0 // pred_check
    _
  $region31: #{q_forward.1} parent=0 // pred_check_branch
    %33 = sbr.rel (0) target = $region33
  $region32: #{q_forward.1} parent=0 // pred_region
    _
  $region33: #{q_forward.1} parent=0 // pred_fallthru
    _
  // Predicated region
  $region34: #{q_forward.1} parent=0 // pred_check
    _
  $region35: #{q_forward.1} parent=0 // pred_check_branch
    %35 = sbr.rel (0) target = $region37
  $region36: #{q_forward.1} parent=0 // pred_region
    _
  $region37: #{q_forward.1} parent=0 // pred_fallthru
    _
  // Predicated region
  $region38: #{q_forward.1} parent=0 // pred_check
    _
  $region39: #{q_forward.1} parent=0 // pred_check_branch
    %37 = sbr.rel (0) target = $region41
  $region40: #{q_forward.1} parent=0 // pred_region
    _
  $region41: #{q_forward.1} parent=0 // pred_fallthru
    _
  // Predicated region
  $region42: #{q_forward.1} parent=0 // pred_check
    _
  $region43: #{q_forward.1} parent=0 // pred_check_branch
    %39 = sbr.rel (0) target = $region45
  $region44: #{q_forward.1} parent=0 // pred_region
    _
  $region45: #{q_forward.1} parent=0 // pred_fallthru
    _
  %v40 = vld [vmem:[%s0] sm:$0xff]
  %v41 = vld [vmem:[%s2] sm:$0xff]
  %v42 = vld [vmem:[%s2 + $0x8] sm:$0xff]
  %v43 = vld [vmem:[%s2 + $0x10] sm:$0xff]
  %v44 = vld [vmem:[%s2 + $0x18] sm:$0xff]
  %v45 = vld [vmem:[%s2 + $0x20] sm:$0xff]
  %v46 = vld [vmem:[%s2 + $0x28] sm:$0xff]
  %v47 = vld [vmem:[%s2 + $0x30] sm:$0xff]
  %v48 = vld [vmem:[%s2 + $0x38] sm:$0xff]
  %v49 = vld [vmem:[%s2 + $0x40] sm:$0xff]
  %v50 = vld [vmem:[%s2 + $0x48] sm:$0xff]
  %v51 = vld [vmem:[%s2 + $0x50] sm:$0xff]
  %v52 = vld [vmem:[%s2 + $0x58] sm:$0xff]
  %v53 = vld [vmem:[%s2 + $0x60] sm:$0xff]
  %v54 = vld [vmem:[%s2 + $0x68] sm:$0xff]
  %v55 = vld [vmem:[%s2 + $0x70] sm:$0xff]
  %v56 = vld [vmem:[%s2 + $0x78] sm:$0xff]
  %v57 = vld [vmem:[%s3] sm:$0xf]
  %v59 = vlaneseq
  %v60 = vshrl.u32 %v59, 7
  %v61 = vsub.s32 0, %v60
  %v62 = vrot.slane %v57, %v61
  %v63 = vlaneseq
  %v64 = vshrl.u32 %v63, 7
  %v65 = vsub.s32 1, %v64
  %v66 = vrot.slane %v57, %v65
  %v67 = vlaneseq
  %v68 = vshrl.u32 %v67, 7
  %v69 = vsub.s32 2, %v68
  %v70 = vrot.slane %v57, %v69
  %v71 = vlaneseq
  %v72 = vshrl.u32 %v71, 7
  %v73 = vsub.s32 3, %v72
  %v74 = vrot.slane %v57, %v73
  %vm79 = vcmask 261120
  %v81 = vsel %vm79, %v40, 0
  %83 = vmatprep.subr.mxu0 %v42
  %84 = vmatpush1.msra.mxu0 %v41
  %85 = vmatprep.subr.mxu0 %v46
  %86 = vmatpush1.msra.mxu0 %v45
  %87 = vmatprep.subr.mxu0 %v50
  %88 = vmatpush1.msra.mxu0 %v49
  %89 = vmatprep.subr.mxu0 %v54
  %90 = vmatpush1.msra.mxu0 %v53
  %91 = vmatprep.subr.mxu0 0.0
  %92 = vmatpush1.msra.mxu0 0.0
  %93 = vmatprep.subr.mxu0 0.0
  %94 = vmatpush1.msra.mxu0 0.0
  %95 = vmatprep.subr.mxu0 0.0
  %96 = vmatpush1.msra.mxu0 0.0
  %97 = vmatprep.subr.mxu0 0.0
  %98 = vmatpush1.msra.mxu0 0.0
  %99 = vmatprep.subr.mxu0 0.0
  %100 = vmatpush1.msra.mxu0 0.0
  %101 = vmatprep.subr.mxu0 0.0
  %102 = vmatpush1.msra.mxu0 0.0
  %103 = vmatprep.subr.mxu0 0.0
  %104 = vmatpush1.msra.mxu0 0.0
  %105 = vmatprep.subr.mxu0 0.0
  %106 = vmatpush1.msra.mxu0 0.0
  %107 = vmatprep.subr.mxu0 0.0
  %108 = vmatpush1.msra.mxu0 0.0
  %109 = vmatprep.subr.mxu0 0.0
  %110 = vmatpush1.msra.mxu0 0.0
  %111 = vmatprep.subr.mxu0 0.0
  %112 = vmatpush1.msra.mxu0 0.0
  %113 = vmatprep.subr.mxu0 0.0
  %114 = vmatpush1.msra.mxu0 0.0
  %115 = vmatprep.subr.mxu0 0.0
  %116 = vmatpush1.msra.mxu0 0.0
  %117 = vmatprep.subr.mxu0 0.0
  %118 = vmatpush1.msra.mxu0 0.0
  %119 = vmatprep.subr.mxu0 0.0
  %120 = vmatpush1.msra.mxu0 0.0
  %121 = vmatprep.subr.mxu0 0.0
  %122 = vmatpush1.msra.mxu0 0.0
  %123 = vmatprep.subr.mxu0 0.0
  %124 = vmatpush1.msra.mxu0 0.0
  %125 = vmatprep.subr.mxu0 0.0
  %126 = vmatpush1.msra.mxu0 0.0
  %127 = vmatprep.subr.mxu0 0.0
  %128 = vmatpush1.msra.mxu0 0.0
  %129 = vmatprep.subr.mxu0 0.0
  %130 = vmatpush1.msra.mxu0 0.0
  %131 = vmatprep.subr.mxu0 0.0
  %132 = vmatpush1.msra.mxu0 0.0
  %133 = vmatprep.subr.mxu0 0.0
  %134 = vmatpush1.msra.mxu0 0.0
  %135 = vmatprep.subr.mxu0 0.0
  %136 = vmatpush1.msra.mxu0 0.0
  %137 = vmatprep.subr.mxu0 0.0
  %138 = vmatpush1.msra.mxu0 0.0
  %139 = vmatprep.subr.mxu0 0.0
  %140 = vmatpush1.msra.mxu0 0.0
  %141 = vmatprep.subr.mxu0 0.0
  %142 = vmatpush1.msra.mxu0 0.0
  %143 = vmatprep.subr.mxu0 0.0
  %144 = vmatpush1.msra.mxu0 0.0
  %145 = vmatprep.subr.mxu0 0.0
  %146 = vmatpush1.msra.mxu0 0.0
  %147 = vmatprep.mubr.f32.mxu0 0.0
  %148 = vmatmul.mubr.f32.gmra.mrb[0].mxu0 %v81
  %v149 = vpop.f32.mrb[0].mxu0
  %v150 = vadd.f32 %v62, %v149
  %v151 = vpop.f32.mrb[0].mxu0
  %v152 = vadd.f32 %v66, %v151
  %153 = vdwg.mxu0
  %154 = vmatprep.subr.mxu0 %v44
  %155 = vmatpush1.msra.mxu0 %v43
  %156 = vmatprep.subr.mxu0 %v48
  %157 = vmatpush1.msra.mxu0 %v47
  %158 = vmatprep.subr.mxu0 %v52
  %159 = vmatpush1.msra.mxu0 %v51
  %160 = vmatprep.subr.mxu0 %v56
  %161 = vmatpush1.msra.mxu0 %v55
  %162 = vmatprep.subr.mxu0 0.0
  %163 = vmatpush1.msra.mxu0 0.0
  %164 = vmatprep.subr.mxu0 0.0
  %165 = vmatpush1.msra.mxu0 0.0
  %166 = vmatprep.subr.mxu0 0.0
  %167 = vmatpush1.msra.mxu0 0.0
  %168 = vmatprep.subr.mxu0 0.0
  %169 = vmatpush1.msra.mxu0 0.0
  %170 = vmatprep.subr.mxu0 0.0
  %171 = vmatpush1.msra.mxu0 0.0
  %172 = vmatprep.subr.mxu0 0.0
  %173 = vmatpush1.msra.mxu0 0.0
  %174 = vmatprep.subr.mxu0 0.0
  %175 = vmatpush1.msra.mxu0 0.0
  %176 = vmatprep.subr.mxu0 0.0
  %177 = vmatpush1.msra.mxu0 0.0
  %178 = vmatprep.subr.mxu0 0.0
  %179 = vmatpush1.msra.mxu0 0.0
  %180 = vmatprep.subr.mxu0 0.0
  %181 = vmatpush1.msra.mxu0 0.0
  %182 = vmatprep.subr.mxu0 0.0
  %183 = vmatpush1.msra.mxu0 0.0
  %184 = vmatprep.subr.mxu0 0.0
  %185 = vmatpush1.msra.mxu0 0.0
  %186 = vmatprep.subr.mxu0 0.0
  %187 = vmatpush1.msra.mxu0 0.0
  %188 = vmatprep.subr.mxu0 0.0
  %189 = vmatpush1.msra.mxu0 0.0
  %190 = vmatprep.subr.mxu0 0.0
  %191 = vmatpush1.msra.mxu0 0.0
  %192 = vmatprep.subr.mxu0 0.0
  %193 = vmatpush1.msra.mxu0 0.0
  %194 = vmatprep.subr.mxu0 0.0
  %195 = vmatpush1.msra.mxu0 0.0
  %196 = vmatprep.subr.mxu0 0.0
  %197 = vmatpush1.msra.mxu0 0.0
  %198 = vmatprep.subr.mxu0 0.0
  %199 = vmatpush1.msra.mxu0 0.0
  %200 = vmatprep.subr.mxu0 0.0
  %201 = vmatpush1.msra.mxu0 0.0
  %202 = vmatprep.subr.mxu0 0.0
  %203 = vmatpush1.msra.mxu0 0.0
  %204 = vmatprep.subr.mxu0 0.0
  %205 = vmatpush1.msra.mxu0 0.0
  %206 = vmatprep.subr.mxu0 0.0
  %207 = vmatpush1.msra.mxu0 0.0
  %208 = vmatprep.subr.mxu0 0.0
  %209 = vmatpush1.msra.mxu0 0.0
  %210 = vmatprep.subr.mxu0 0.0
  %211 = vmatpush1.msra.mxu0 0.0
  %212 = vmatprep.subr.mxu0 0.0
  %213 = vmatpush1.msra.mxu0 0.0
  %214 = vmatprep.subr.mxu0 0.0
  %215 = vmatpush1.msra.mxu0 0.0
  %216 = vmatprep.subr.mxu0 0.0
  %217 = vmatpush1.msra.mxu0 0.0
  %218 = vmatprep.mubr.f32.mxu0 0.0
  %219 = vmatmul.mubr.f32.gmra.mrb[0].mxu0 %v81
  %v220 = vpop.f32.mrb[0].mxu0
  %v221 = vadd.f32 %v70, %v220
  %v222 = vpop.f32.mrb[0].mxu0
  %v223 = vadd.f32 %v74, %v222
  %224 = vdwg.mxu0
  %v225 = vmax.f32 %v150, 0.0
  %v226 = vmax.f32 %v152, 0.0
  %v227 = vmax.f32 %v221, 0.0
  %v228 = vmax.f32 %v223, 0.0
  %v229 = vld [vmem:[%s1] sm:$0xff]
  %v230 = vld [vmem:[%s4] sm:$0xff]
  %v231 = vld [vmem:[%s4 + $0x8] sm:$0xff]
  %v232 = vld [vmem:[%s4 + $0x10] sm:$0xff]
  %v233 = vld [vmem:[%s4 + $0x18] sm:$0xff]
  %v234 = vld [vmem:[%s5] sm:$0xf]
  %v236 = vlaneseq
  %v237 = vshrl.u32 %v236, 7
  %v238 = vsub.s32 0, %v237
  %v239 = vrot.slane %v234, %v238
  %v240 = vlaneseq
  %v241 = vshrl.u32 %v240, 7
  %v242 = vsub.s32 1, %v241
  %v243 = vrot.slane %v234, %v242
  %v244 = vlaneseq
  %v245 = vshrl.u32 %v244, 7
  %v246 = vsub.s32 2, %v245
  %v247 = vrot.slane %v234, %v246
  %v248 = vlaneseq
  %v249 = vshrl.u32 %v248, 7
  %v250 = vsub.s32 3, %v249
  %v251 = vrot.slane %v234, %v250
  %vm256 = vcmask 64512
  %v258 = vsel %vm256, %v229, 0
  %260 = vmatprep.subr.mxu0 %v231
  %261 = vmatpush1.msra.mxu0 %v230
  %262 = vmatprep.subr.mxu0 0.0
  %263 = vmatpush1.msra.mxu0 0.0
  %264 = vmatprep.subr.mxu0 0.0
  %265 = vmatpush1.msra.mxu0 0.0
  %266 = vmatprep.subr.mxu0 0.0
  %267 = vmatpush1.msra.mxu0 0.0
  %268 = vmatprep.subr.mxu0 0.0
  %269 = vmatpush1.msra.mxu0 0.0
  %270 = vmatprep.subr.mxu0 0.0
  %271 = vmatpush1.msra.mxu0 0.0
  %272 = vmatprep.subr.mxu0 0.0
  %273 = vmatpush1.msra.mxu0 0.0
  %274 = vmatprep.subr.mxu0 0.0
  %275 = vmatpush1.msra.mxu0 0.0
  %276 = vmatprep.subr.mxu0 0.0
  %277 = vmatpush1.msra.mxu0 0.0
  %278 = vmatprep.subr.mxu0 0.0
  %279 = vmatpush1.msra.mxu0 0.0
  %280 = vmatprep.subr.mxu0 0.0
  %281 = vmatpush1.msra.mxu0 0.0
  %282 = vmatprep.subr.mxu0 0.0
  %283 = vmatpush1.msra.mxu0 0.0
  %284 = vmatprep.subr.mxu0 0.0
  %285 = vmatpush1.msra.mxu0 0.0
  %286 = vmatprep.subr.mxu0 0.0
  %287 = vmatpush1.msra.mxu0 0.0
  %288 = vmatprep.subr.mxu0 0.0
  %289 = vmatpush1.msra.mxu0 0.0
  %290 = vmatprep.subr.mxu0 0.0
  %291 = vmatpush1.msra.mxu0 0.0
  %292 = vmatprep.subr.mxu0 0.0
  %293 = vmatpush1.msra.mxu0 0.0
  %294 = vmatprep.subr.mxu0 0.0
  %295 = vmatpush1.msra.mxu0 0.0
  %296 = vmatprep.subr.mxu0 0.0
  %297 = vmatpush1.msra.mxu0 0.0
  %298 = vmatprep.subr.mxu0 0.0
  %299 = vmatpush1.msra.mxu0 0.0
  %300 = vmatprep.subr.mxu0 0.0
  %301 = vmatpush1.msra.mxu0 0.0
  %302 = vmatprep.subr.mxu0 0.0
  %303 = vmatpush1.msra.mxu0 0.0
  %304 = vmatprep.subr.mxu0 0.0
  %305 = vmatpush1.msra.mxu0 0.0
  %306 = vmatprep.subr.mxu0 0.0
  %307 = vmatpush1.msra.mxu0 0.0
  %308 = vmatprep.subr.mxu0 0.0
  %309 = vmatpush1.msra.mxu0 0.0
  %310 = vmatprep.subr.mxu0 0.0
  %311 = vmatpush1.msra.mxu0 0.0
  %312 = vmatprep.subr.mxu0 0.0
  %313 = vmatpush1.msra.mxu0 0.0
  %314 = vmatprep.subr.mxu0 0.0
  %315 = vmatpush1.msra.mxu0 0.0
  %316 = vmatprep.subr.mxu0 0.0
  %317 = vmatpush1.msra.mxu0 0.0
  %318 = vmatprep.subr.mxu0 0.0
  %319 = vmatpush1.msra.mxu0 0.0
  %320 = vmatprep.subr.mxu0 0.0
  %321 = vmatpush1.msra.mxu0 0.0
  %322 = vmatprep.subr.mxu0 0.0
  %323 = vmatpush1.msra.mxu0 0.0
  %324 = vmatprep.mubr.f32.mxu0 0.0
  %325 = vmatmul.mubr.f32.gmra.mrb[0].mxu0 %v258
  %v326 = vpop.f32.mrb[0].mxu0
  %v327 = vadd.f32 %v239, %v326
  %v328 = vpop.f32.mrb[0].mxu0
  %v329 = vadd.f32 %v243, %v328
  %330 = vdwg.mxu0
  %331 = vmatprep.subr.mxu0 %v233
  %332 = vmatpush1.msra.mxu0 %v232
  %333 = vmatprep.subr.mxu0 0.0
  %334 = vmatpush1.msra.mxu0 0.0
  %335 = vmatprep.subr.mxu0 0.0
  %336 = vmatpush1.msra.mxu0 0.0
  %337 = vmatprep.subr.mxu0 0.0
  %338 = vmatpush1.msra.mxu0 0.0
  %339 = vmatprep.subr.mxu0 0.0
  %340 = vmatpush1.msra.mxu0 0.0
  %341 = vmatprep.subr.mxu0 0.0
  %342 = vmatpush1.msra.mxu0 0.0
  %343 = vmatprep.subr.mxu0 0.0
  %344 = vmatpush1.msra.mxu0 0.0
  %345 = vmatprep.subr.mxu0 0.0
  %346 = vmatpush1.msra.mxu0 0.0
  %347 = vmatprep.subr.mxu0 0.0
  %348 = vmatpush1.msra.mxu0 0.0
  %349 = vmatprep.subr.mxu0 0.0
  %350 = vmatpush1.msra.mxu0 0.0
  %351 = vmatprep.subr.mxu0 0.0
  %352 = vmatpush1.msra.mxu0 0.0
  %353 = vmatprep.subr.mxu0 0.0
  %354 = vmatpush1.msra.mxu0 0.0
  %355 = vmatprep.subr.mxu0 0.0
  %356 = vmatpush1.msra.mxu0 0.0
  %357 = vmatprep.subr.mxu0 0.0
  %358 = vmatpush1.msra.mxu0 0.0
  %359 = vmatprep.subr.mxu0 0.0
  %360 = vmatpush1.msra.mxu0 0.0
  %361 = vmatprep.subr.mxu0 0.0
  %362 = vmatpush1.msra.mxu0 0.0
  %363 = vmatprep.subr.mxu0 0.0
  %364 = vmatpush1.msra.mxu0 0.0
  %365 = vmatprep.subr.mxu0 0.0
  %366 = vmatpush1.msra.mxu0 0.0
  %367 = vmatprep.subr.mxu0 0.0
  %368 = vmatpush1.msra.mxu0 0.0
  %369 = vmatprep.subr.mxu0 0.0
  %370 = vmatpush1.msra.mxu0 0.0
  %371 = vmatprep.subr.mxu0 0.0
  %372 = vmatpush1.msra.mxu0 0.0
  %373 = vmatprep.subr.mxu0 0.0
  %374 = vmatpush1.msra.mxu0 0.0
  %375 = vmatprep.subr.mxu0 0.0
  %376 = vmatpush1.msra.mxu0 0.0
  %377 = vmatprep.subr.mxu0 0.0
  %378 = vmatpush1.msra.mxu0 0.0
  %379 = vmatprep.subr.mxu0 0.0
  %380 = vmatpush1.msra.mxu0 0.0
  %381 = vmatprep.subr.mxu0 0.0
  %382 = vmatpush1.msra.mxu0 0.0
  %383 = vmatprep.subr.mxu0 0.0
  %384 = vmatpush1.msra.mxu0 0.0
  %385 = vmatprep.subr.mxu0 0.0
  %386 = vmatpush1.msra.mxu0 0.0
  %387 = vmatprep.subr.mxu0 0.0
  %388 = vmatpush1.msra.mxu0 0.0
  %389 = vmatprep.subr.mxu0 0.0
  %390 = vmatpush1.msra.mxu0 0.0
  %391 = vmatprep.subr.mxu0 0.0
  %392 = vmatpush1.msra.mxu0 0.0
  %393 = vmatprep.subr.mxu0 0.0
  %394 = vmatpush1.msra.mxu0 0.0
  %395 = vmatprep.mubr.f32.mxu0 0.0
  %396 = vmatmul.mubr.f32.gmra.mrb[0].mxu0 %v258
  %v397 = vpop.f32.mrb[0].mxu0
  %v398 = vadd.f32 %v247, %v397
  %v399 = vpop.f32.mrb[0].mxu0
  %v400 = vadd.f32 %v251, %v399
  %401 = vdwg.mxu0
  %v402 = vmax.f32 %v327, 0.0
  %v403 = vmax.f32 %v329, 0.0
  %v404 = vmax.f32 %v398, 0.0
  %v405 = vmax.f32 %v400, 0.0
  %v406 = vld [vmem:[%s6] sm:$0xff]
  %v407 = vld [vmem:[%s6 + $0x8] sm:$0xff]
  %v408 = vld [vmem:[%s6 + $0x10] sm:$0xff]
  %v409 = vld [vmem:[%s6 + $0x18] sm:$0xff]
  %v410 = vld [vmem:[%s6 + $0x20] sm:$0xff]
  %v411 = vld [vmem:[%s6 + $0x28] sm:$0xff]
  %v412 = vld [vmem:[%s6 + $0x30] sm:$0xff]
  %v413 = vld [vmem:[%s6 + $0x38] sm:$0xff]
  %v414 = vld [vmem:[%s6 + $0x40] sm:$0xff]
  %v415 = vld [vmem:[%s6 + $0x48] sm:$0xff]
  %v416 = vld [vmem:[%s6 + $0x50] sm:$0xff]
  %v417 = vld [vmem:[%s6 + $0x58] sm:$0xff]
  %v418 = vld [vmem:[%s6 + $0x60] sm:$0xff]
  %v419 = vld [vmem:[%s6 + $0x68] sm:$0xff]
  %v420 = vld [vmem:[%s6 + $0x70] sm:$0xff]
  %v421 = vld [vmem:[%s6 + $0x78] sm:$0xff]
  %v422 = vld [vmem:[%s6 + $0x80] sm:$0xff]
  %v423 = vld [vmem:[%s6 + $0x88] sm:$0xff]
  %v424 = vld [vmem:[%s6 + $0x90] sm:$0xff]
  %v425 = vld [vmem:[%s6 + $0x98] sm:$0xff]
  %v426 = vld [vmem:[%s6 + $0xa0] sm:$0xff]
  %v427 = vld [vmem:[%s6 + $0xa8] sm:$0xff]
  %v428 = vld [vmem:[%s6 + $0xb0] sm:$0xff]
  %v429 = vld [vmem:[%s6 + $0xb8] sm:$0xff]
  %v430 = vld [vmem:[%s6 + $0xc0] sm:$0xff]
  %v431 = vld [vmem:[%s6 + $0xc8] sm:$0xff]
  %v432 = vld [vmem:[%s6 + $0xd0] sm:$0xff]
  %v433 = vld [vmem:[%s6 + $0xd8] sm:$0xff]
  %v434 = vld [vmem:[%s6 + $0xe0] sm:$0xff]
  %v435 = vld [vmem:[%s6 + $0xe8] sm:$0xff]
  %v436 = vld [vmem:[%s6 + $0xf0] sm:$0xff]
  %v437 = vld [vmem:[%s6 + $0xf8] sm:$0xff]
  %v438 = vld [vmem:[%s6 + $0x100] sm:$0xff]
  %v439 = vld [vmem:[%s6 + $0x108] sm:$0xff]
  %v440 = vld [vmem:[%s6 + $0x110] sm:$0xff]
  %v441 = vld [vmem:[%s6 + $0x118] sm:$0xff]
  %v442 = vld [vmem:[%s6 + $0x120] sm:$0xff]
  %v443 = vld [vmem:[%s6 + $0x128] sm:$0xff]
  %v444 = vld [vmem:[%s6 + $0x130] sm:$0xff]
  %v445 = vld [vmem:[%s6 + $0x138] sm:$0xff]
  %v446 = vld [vmem:[%s6 + $0x140] sm:$0xff]
  %v447 = vld [vmem:[%s6 + $0x148] sm:$0xff]
  %v448 = vld [vmem:[%s6 + $0x150] sm:$0xff]
  %v449 = vld [vmem:[%s6 + $0x158] sm:$0xff]
  %v450 = vld [vmem:[%s6 + $0x160] sm:$0xff]
  %v451 = vld [vmem:[%s6 + $0x168] sm:$0xff]
  %v452 = vld [vmem:[%s6 + $0x170] sm:$0xff]
  %v453 = vld [vmem:[%s6 + $0x178] sm:$0xff]
  %v454 = vld [vmem:[%s6 + $0x180] sm:$0xff]
  %v455 = vld [vmem:[%s6 + $0x188] sm:$0xff]
  %v456 = vld [vmem:[%s6 + $0x190] sm:$0xff]
  %v457 = vld [vmem:[%s6 + $0x198] sm:$0xff]
  %v458 = vld [vmem:[%s6 + $0x1a0] sm:$0xff]
  %v459 = vld [vmem:[%s6 + $0x1a8] sm:$0xff]
  %v460 = vld [vmem:[%s6 + $0x1b0] sm:$0xff]
  %v461 = vld [vmem:[%s6 + $0x1b8] sm:$0xff]
  %v462 = vld [vmem:[%s6 + $0x1c0] sm:$0xff]
  %v463 = vld [vmem:[%s6 + $0x1c8] sm:$0xff]
  %v464 = vld [vmem:[%s6 + $0x1d0] sm:$0xff]
  %v465 = vld [vmem:[%s6 + $0x1d8] sm:$0xff]
  %v466 = vld [vmem:[%s6 + $0x1e0] sm:$0xff]
  %v467 = vld [vmem:[%s6 + $0x1e8] sm:$0xff]
  %v468 = vld [vmem:[%s6 + $0x1f0] sm:$0xff]
  %v469 = vld [vmem:[%s6 + $0x1f8] sm:$0xff]
  %v470 = vld [vmem:[%s7] sm:$0xff]
  %v471 = vld [vmem:[%s7 + $0x8] sm:$0xff]
  %v472 = vld [vmem:[%s7 + $0x10] sm:$0xff]
  %v473 = vld [vmem:[%s7 + $0x18] sm:$0xff]
  %v474 = vld [vmem:[%s7 + $0x20] sm:$0xff]
  %v475 = vld [vmem:[%s7 + $0x28] sm:$0xff]
  %v476 = vld [vmem:[%s7 + $0x30] sm:$0xff]
  %v477 = vld [vmem:[%s7 + $0x38] sm:$0xff]
  %v478 = vld [vmem:[%s7 + $0x40] sm:$0xff]
  %v479 = vld [vmem:[%s7 + $0x48] sm:$0xff]
  %v480 = vld [vmem:[%s7 + $0x50] sm:$0xff]
  %v481 = vld [vmem:[%s7 + $0x58] sm:$0xff]
  %v482 = vld [vmem:[%s7 + $0x60] sm:$0xff]
  %v483 = vld [vmem:[%s7 + $0x68] sm:$0xff]
  %v484 = vld [vmem:[%s7 + $0x70] sm:$0xff]
  %v485 = vld [vmem:[%s7 + $0x78] sm:$0xff]
  %v486 = vld [vmem:[%s7 + $0x80] sm:$0xff]
  %v487 = vld [vmem:[%s7 + $0x88] sm:$0xff]
  %v488 = vld [vmem:[%s7 + $0x90] sm:$0xff]
  %v489 = vld [vmem:[%s7 + $0x98] sm:$0xff]
  %v490 = vld [vmem:[%s7 + $0xa0] sm:$0xff]
  %v491 = vld [vmem:[%s7 + $0xa8] sm:$0xff]
  %v492 = vld [vmem:[%s7 + $0xb0] sm:$0xff]
  %v493 = vld [vmem:[%s7 + $0xb8] sm:$0xff]
  %v494 = vld [vmem:[%s7 + $0xc0] sm:$0xff]
  %v495 = vld [vmem:[%s7 + $0xc8] sm:$0xff]
  %v496 = vld [vmem:[%s7 + $0xd0] sm:$0xff]
  %v497 = vld [vmem:[%s7 + $0xd8] sm:$0xff]
  %v498 = vld [vmem:[%s7 + $0xe0] sm:$0xff]
  %v499 = vld [vmem:[%s7 + $0xe8] sm:$0xff]
  %v500 = vld [vmem:[%s7 + $0xf0] sm:$0xff]
  %v501 = vld [vmem:[%s7 + $0xf8] sm:$0xff]
  %v502 = vld [vmem:[%s7 + $0x100] sm:$0xff]
  %v503 = vld [vmem:[%s7 + $0x108] sm:$0xff]
  %v504 = vld [vmem:[%s7 + $0x110] sm:$0xff]
  %v505 = vld [vmem:[%s7 + $0x118] sm:$0xff]
  %v506 = vld [vmem:[%s7 + $0x120] sm:$0xff]
  %v507 = vld [vmem:[%s7 + $0x128] sm:$0xff]
  %v508 = vld [vmem:[%s7 + $0x130] sm:$0xff]
  %v509 = vld [vmem:[%s7 + $0x138] sm:$0xff]
  %v510 = vld [vmem:[%s7 + $0x140] sm:$0xff]
  %v511 = vld [vmem:[%s7 + $0x148] sm:$0xff]
  %v512 = vld [vmem:[%s7 + $0x150] sm:$0xff]
  %v513 = vld [vmem:[%s7 + $0x158] sm:$0xff]
  %v514 = vld [vmem:[%s7 + $0x160] sm:$0xff]
  %v515 = vld [vmem:[%s7 + $0x168] sm:$0xff]
  %v516 = vld [vmem:[%s7 + $0x170] sm:$0xff]
  %v517 = vld [vmem:[%s7 + $0x178] sm:$0xff]
  %v518 = vld [vmem:[%s7 + $0x180] sm:$0xff]
  %v519 = vld [vmem:[%s7 + $0x188] sm:$0xff]
  %v520 = vld [vmem:[%s7 + $0x190] sm:$0xff]
  %v521 = vld [vmem:[%s7 + $0x198] sm:$0xff]
  %v522 = vld [vmem:[%s7 + $0x1a0] sm:$0xff]
  %v523 = vld [vmem:[%s7 + $0x1a8] sm:$0xff]
  %v524 = vld [vmem:[%s7 + $0x1b0] sm:$0xff]
  %v525 = vld [vmem:[%s7 + $0x1b8] sm:$0xff]
  %v526 = vld [vmem:[%s7 + $0x1c0] sm:$0xff]
  %v527 = vld [vmem:[%s7 + $0x1c8] sm:$0xff]
  %v528 = vld [vmem:[%s7 + $0x1d0] sm:$0xff]
  %v529 = vld [vmem:[%s7 + $0x1d8] sm:$0xff]
  %v530 = vld [vmem:[%s7 + $0x1e0] sm:$0xff]
  %v531 = vld [vmem:[%s7 + $0x1e8] sm:$0xff]
  %v532 = vld [vmem:[%s7 + $0x1f0] sm:$0xff]
  %v533 = vld [vmem:[%s7 + $0x1f8] sm:$0xff]
  %534 = vmatprep.subr.mxu0 0.0
  %535 = vmatpush1.msra.mxu0 %v470
  %536 = vmatprep.subr.mxu0 0.0
  %537 = vmatpush1.msra.mxu0 %v471
  %538 = vmatprep.subr.mxu0 0.0
  %539 = vmatpush1.msra.mxu0 %v472
  %540 = vmatprep.subr.mxu0 0.0
  %541 = vmatpush1.msra.mxu0 %v473
  %542 = vmatprep.subr.mxu0 0.0
  %543 = vmatpush1.msra.mxu0 %v474
  %544 = vmatprep.subr.mxu0 0.0
  %545 = vmatpush1.msra.mxu0 %v475
  %546 = vmatprep.subr.mxu0 0.0
  %547 = vmatpush1.msra.mxu0 %v476
  %548 = vmatprep.subr.mxu0 0.0
  %549 = vmatpush1.msra.mxu0 %v477
  %550 = vmatprep.subr.mxu0 0.0
  %551 = vmatpush1.msra.mxu0 %v478
  %552 = vmatprep.subr.mxu0 0.0
  %553 = vmatpush1.msra.mxu0 %v479
  %554 = vmatprep.subr.mxu0 0.0
  %555 = vmatpush1.msra.mxu0 %v480
  %556 = vmatprep.subr.mxu0 0.0
  %557 = vmatpush1.msra.mxu0 %v481
  %558 = vmatprep.subr.mxu0 0.0
  %559 = vmatpush1.msra.mxu0 %v482
  %560 = vmatprep.subr.mxu0 0.0
  %561 = vmatpush1.msra.mxu0 %v483
  %562 = vmatprep.subr.mxu0 0.0
  %563 = vmatpush1.msra.mxu0 %v484
  %564 = vmatprep.subr.mxu0 0.0
  %565 = vmatpush1.msra.mxu0 %v485
  %566 = vmatprep.subr.mxu0 0.0
  %567 = vmatpush1.msra.mxu0 %v486
  %568 = vmatprep.subr.mxu0 0.0
  %569 = vmatpush1.msra.mxu0 %v487
  %570 = vmatprep.subr.mxu0 0.0
  %571 = vmatpush1.msra.mxu0 %v488
  %572 = vmatprep.subr.mxu0 0.0
  %573 = vmatpush1.msra.mxu0 %v489
  %574 = vmatprep.subr.mxu0 0.0
  %575 = vmatpush1.msra.mxu0 %v490
  %576 = vmatprep.subr.mxu0 0.0
  %577 = vmatpush1.msra.mxu0 %v491
  %578 = vmatprep.subr.mxu0 0.0
  %579 = vmatpush1.msra.mxu0 %v492
  %580 = vmatprep.subr.mxu0 0.0
  %581 = vmatpush1.msra.mxu0 %v493
  %582 = vmatprep.subr.mxu0 0.0
  %583 = vmatpush1.msra.mxu0 %v494
  %584 = vmatprep.subr.mxu0 0.0
  %585 = vmatpush1.msra.mxu0 %v495
  %586 = vmatprep.subr.mxu0 0.0
  %587 = vmatpush1.msra.mxu0 %v496
  %588 = vmatprep.subr.mxu0 0.0
  %589 = vmatpush1.msra.mxu0 %v497
  %590 = vmatprep.subr.mxu0 0.0
  %591 = vmatpush1.msra.mxu0 %v498
  %592 = vmatprep.subr.mxu0 0.0
  %593 = vmatpush1.msra.mxu0 %v499
  %594 = vmatprep.subr.mxu0 0.0
  %595 = vmatpush1.msra.mxu0 %v500
  %596 = vmatprep.subr.mxu0 0.0
  %597 = vmatpush1.msra.mxu0 %v501
  %598 = vmatprep.mubr.f32.mxu0 %v403
  %599 = vmatmul.mubr.f32.gmra.mrb[0].mxu0 %v402
  %v600 = vpop.f32.mrb[0].mxu0
  %v601 = vadd.f32 0.0, %v600
  %v602 = vpop.f32.mrb[0].mxu0
  %603 = vdwg.mxu0
  %604 = vmatprep.subr.mxu0 0.0
  %605 = vmatpush1.msra.mxu0 %v502
  %606 = vmatprep.subr.mxu0 0.0
  %607 = vmatpush1.msra.mxu0 %v503
  %608 = vmatprep.subr.mxu0 0.0
  %609 = vmatpush1.msra.mxu0 %v504
  %610 = vmatprep.subr.mxu0 0.0
  %611 = vmatpush1.msra.mxu0 %v505
  %612 = vmatprep.subr.mxu0 0.0
  %613 = vmatpush1.msra.mxu0 %v506
  %614 = vmatprep.subr.mxu0 0.0
  %615 = vmatpush1.msra.mxu0 %v507
  %616 = vmatprep.subr.mxu0 0.0
  %617 = vmatpush1.msra.mxu0 %v508
  %618 = vmatprep.subr.mxu0 0.0
  %619 = vmatpush1.msra.mxu0 %v509
  %620 = vmatprep.subr.mxu0 0.0
  %621 = vmatpush1.msra.mxu0 %v510
  %622 = vmatprep.subr.mxu0 0.0
  %623 = vmatpush1.msra.mxu0 %v511
  %624 = vmatprep.subr.mxu0 0.0
  %625 = vmatpush1.msra.mxu0 %v512
  %626 = vmatprep.subr.mxu0 0.0
  %627 = vmatpush1.msra.mxu0 %v513
  %628 = vmatprep.subr.mxu0 0.0
  %629 = vmatpush1.msra.mxu0 %v514
  %630 = vmatprep.subr.mxu0 0.0
  %631 = vmatpush1.msra.mxu0 %v515
  %632 = vmatprep.subr.mxu0 0.0
  %633 = vmatpush1.msra.mxu0 %v516
  %634 = vmatprep.subr.mxu0 0.0
  %635 = vmatpush1.msra.mxu0 %v517
  %636 = vmatprep.subr.mxu0 0.0
  %637 = vmatpush1.msra.mxu0 %v518
  %638 = vmatprep.subr.mxu0 0.0
  %639 = vmatpush1.msra.mxu0 %v519
  %640 = vmatprep.subr.mxu0 0.0
  %641 = vmatpush1.msra.mxu0 %v520
  %642 = vmatprep.subr.mxu0 0.0
  %643 = vmatpush1.msra.mxu0 %v521
  %644 = vmatprep.subr.mxu0 0.0
  %645 = vmatpush1.msra.mxu0 %v522
  %646 = vmatprep.subr.mxu0 0.0
  %647 = vmatpush1.msra.mxu0 %v523
  %648 = vmatprep.subr.mxu0 0.0
  %649 = vmatpush1.msra.mxu0 %v524
  %650 = vmatprep.subr.mxu0 0.0
  %651 = vmatpush1.msra.mxu0 %v525
  %652 = vmatprep.subr.mxu0 0.0
  %653 = vmatpush1.msra.mxu0 %v526
  %654 = vmatprep.subr.mxu0 0.0
  %655 = vmatpush1.msra.mxu0 %v527
  %656 = vmatprep.subr.mxu0 0.0
  %657 = vmatpush1.msra.mxu0 %v528
  %658 = vmatprep.subr.mxu0 0.0
  %659 = vmatpush1.msra.mxu0 %v529
  %660 = vmatprep.subr.mxu0 0.0
  %661 = vmatpush1.msra.mxu0 %v530
  %662 = vmatprep.subr.mxu0 0.0
  %663 = vmatpush1.msra.mxu0 %v531
  %664 = vmatprep.subr.mxu0 0.0
  %665 = vmatpush1.msra.mxu0 %v532
  %666 = vmatprep.subr.mxu0 0.0
  %667 = vmatpush1.msra.mxu0 %v533
  %668 = vmatprep.mubr.f32.mxu0 %v405
  %669 = vmatmul.mubr.f32.gmra.mrb[0].mxu0 %v404
  %v670 = vpop.f32.mrb[0].mxu0
  %v671 = vadd.f32 %v601, %v670
  %v672 = vpop.f32.mrb[0].mxu0
  %673 = vdwg.mxu0
  %674 = vmatprep.subr.mxu0 0.0
  %675 = vmatpush1.msra.mxu0 %v406
  %676 = vmatprep.subr.mxu0 0.0
  %677 = vmatpush1.msra.mxu0 %v407
  %678 = vmatprep.subr.mxu0 0.0
  %679 = vmatpush1.msra.mxu0 %v408
  %680 = vmatprep.subr.mxu0 0.0
  %681 = vmatpush1.msra.mxu0 %v409
  %682 = vmatprep.subr.mxu0 0.0
  %683 = vmatpush1.msra.mxu0 %v410
  %684 = vmatprep.subr.mxu0 0.0
  %685 = vmatpush1.msra.mxu0 %v411
  %686 = vmatprep.subr.mxu0 0.0
  %687 = vmatpush1.msra.mxu0 %v412
  %688 = vmatprep.subr.mxu0 0.0
  %689 = vmatpush1.msra.mxu0 %v413
  %690 = vmatprep.subr.mxu0 0.0
  %691 = vmatpush1.msra.mxu0 %v414
  %692 = vmatprep.subr.mxu0 0.0
  %693 = vmatpush1.msra.mxu0 %v415
  %694 = vmatprep.subr.mxu0 0.0
  %695 = vmatpush1.msra.mxu0 %v416
  %696 = vmatprep.subr.mxu0 0.0
  %697 = vmatpush1.msra.mxu0 %v417
  %698 = vmatprep.subr.mxu0 0.0
  %699 = vmatpush1.msra.mxu0 %v418
  %700 = vmatprep.subr.mxu0 0.0
  %701 = vmatpush1.msra.mxu0 %v419
  %702 = vmatprep.subr.mxu0 0.0
  %703 = vmatpush1.msra.mxu0 %v420
  %704 = vmatprep.subr.mxu0 0.0
  %705 = vmatpush1.msra.mxu0 %v421
  %706 = vmatprep.subr.mxu0 0.0
  %707 = vmatpush1.msra.mxu0 %v422
  %708 = vmatprep.subr.mxu0 0.0
  %709 = vmatpush1.msra.mxu0 %v423
  %710 = vmatprep.subr.mxu0 0.0
  %711 = vmatpush1.msra.mxu0 %v424
  %712 = vmatprep.subr.mxu0 0.0
  %713 = vmatpush1.msra.mxu0 %v425
  %714 = vmatprep.subr.mxu0 0.0
  %715 = vmatpush1.msra.mxu0 %v426
  %716 = vmatprep.subr.mxu0 0.0
  %717 = vmatpush1.msra.mxu0 %v427
  %718 = vmatprep.subr.mxu0 0.0
  %719 = vmatpush1.msra.mxu0 %v428
  %720 = vmatprep.subr.mxu0 0.0
  %721 = vmatpush1.msra.mxu0 %v429
  %722 = vmatprep.subr.mxu0 0.0
  %723 = vmatpush1.msra.mxu0 %v430
  %724 = vmatprep.subr.mxu0 0.0
  %725 = vmatpush1.msra.mxu0 %v431
  %726 = vmatprep.subr.mxu0 0.0
  %727 = vmatpush1.msra.mxu0 %v432
  %728 = vmatprep.subr.mxu0 0.0
  %729 = vmatpush1.msra.mxu0 %v433
  %730 = vmatprep.subr.mxu0 0.0
  %731 = vmatpush1.msra.mxu0 %v434
  %732 = vmatprep.subr.mxu0 0.0
  %733 = vmatpush1.msra.mxu0 %v435
  %734 = vmatprep.subr.mxu0 0.0
  %735 = vmatpush1.msra.mxu0 %v436
  %736 = vmatprep.subr.mxu0 0.0
  %737 = vmatpush1.msra.mxu0 %v437
  %738 = vmatprep.mubr.f32.mxu0 %v226
  %739 = vmatmul.mubr.f32.gmra.mrb[0].mxu0 %v225
  %v740 = vpop.f32.mrb[0].mxu0
  %v741 = vadd.f32 %v671, %v740
  %v742 = vpop.f32.mrb[0].mxu0
  %743 = vdwg.mxu0
  %744 = vmatprep.subr.mxu0 0.0
  %745 = vmatpush1.msra.mxu0 %v438
  %746 = vmatprep.subr.mxu0 0.0
  %747 = vmatpush1.msra.mxu0 %v439
  %748 = vmatprep.subr.mxu0 0.0
  %749 = vmatpush1.msra.mxu0 %v440
  %750 = vmatprep.subr.mxu0 0.0
  %751 = vmatpush1.msra.mxu0 %v441
  %752 = vmatprep.subr.mxu0 0.0
  %753 = vmatpush1.msra.mxu0 %v442
  %754 = vmatprep.subr.mxu0 0.0
  %755 = vmatpush1.msra.mxu0 %v443
  %756 = vmatprep.subr.mxu0 0.0
  %757 = vmatpush1.msra.mxu0 %v444
  %758 = vmatprep.subr.mxu0 0.0
  %759 = vmatpush1.msra.mxu0 %v445
  %760 = vmatprep.subr.mxu0 0.0
  %761 = vmatpush1.msra.mxu0 %v446
  %762 = vmatprep.subr.mxu0 0.0
  %763 = vmatpush1.msra.mxu0 %v447
  %764 = vmatprep.subr.mxu0 0.0
  %765 = vmatpush1.msra.mxu0 %v448
  %766 = vmatprep.subr.mxu0 0.0
  %767 = vmatpush1.msra.mxu0 %v449
  %768 = vmatprep.subr.mxu0 0.0
  %769 = vmatpush1.msra.mxu0 %v450
  %770 = vmatprep.subr.mxu0 0.0
  %771 = vmatpush1.msra.mxu0 %v451
  %772 = vmatprep.subr.mxu0 0.0
  %773 = vmatpush1.msra.mxu0 %v452
  %774 = vmatprep.subr.mxu0 0.0
  %775 = vmatpush1.msra.mxu0 %v453
  %776 = vmatprep.subr.mxu0 0.0
  %777 = vmatpush1.msra.mxu0 %v454
  %778 = vmatprep.subr.mxu0 0.0
  %779 = vmatpush1.msra.mxu0 %v455
  %780 = vmatprep.subr.mxu0 0.0
  %781 = vmatpush1.msra.mxu0 %v456
  %782 = vmatprep.subr.mxu0 0.0
  %783 = vmatpush1.msra.mxu0 %v457
  %784 = vmatprep.subr.mxu0 0.0
  %785 = vmatpush1.msra.mxu0 %v458
  %786 = vmatprep.subr.mxu0 0.0
  %787 = vmatpush1.msra.mxu0 %v459
  %788 = vmatprep.subr.mxu0 0.0
  %789 = vmatpush1.msra.mxu0 %v460
  %790 = vmatprep.subr.mxu0 0.0
  %791 = vmatpush1.msra.mxu0 %v461
  %792 = vmatprep.subr.mxu0 0.0
  %793 = vmatpush1.msra.mxu0 %v462
  %794 = vmatprep.subr.mxu0 0.0
  %795 = vmatpush1.msra.mxu0 %v463
  %796 = vmatprep.subr.mxu0 0.0
  %797 = vmatpush1.msra.mxu0 %v464
  %798 = vmatprep.subr.mxu0 0.0
  %799 = vmatpush1.msra.mxu0 %v465
  %800 = vmatprep.subr.mxu0 0.0
  %801 = vmatpush1.msra.mxu0 %v466
  %802 = vmatprep.subr.mxu0 0.0
  %803 = vmatpush1.msra.mxu0 %v467
  %804 = vmatprep.subr.mxu0 0.0
  %805 = vmatpush1.msra.mxu0 %v468
  %806 = vmatprep.subr.mxu0 0.0
  %807 = vmatpush1.msra.mxu0 %v469
  %808 = vmatprep.mubr.f32.mxu0 %v228
  %809 = vmatmul.mubr.f32.gmra.mrb[0].mxu0 %v227
  %v810 = vpop.f32.mrb[0].mxu0
  %v811 = vadd.f32 %v741, %v810
  %v812 = vpop.f32.mrb[0].mxu0
  %813 = vdwg.mxu0
  %v814 = vld [vmem:[%s8] sm:$0x1]
  %v816 = vlaneseq
  %v817 = vshrl.u32 %v816, 7
  %v818 = vsub.s32 0, %v817
  %v819 = vrot.slane %v814, %v818
  %v821 = vadd.f32 %v811, %v819
  %v822 = vmax.f32 %v821, 0.0
  %v823 = vld [vmem:[%s9] sm:$0x1]
  %v825 = vlaneseq
  %v826 = vshrl.u32 %v825, 7
  %v827 = vsub.s32 0, %v826
  %v828 = vrot.slane %v823, %v827
  %v830 = vmul.f32 %v822, %v828
  %vm831 = vcmask 523264
  %v832 = vsel %vm831, %v830, 0.0
  %833 = vadd.xlane.f32.xlu0 %v832
  %v834 = vpop.xlane.xlu0 %833
  %v835 = vld [vmem:[#allocation2] sm:$0x1]
  %v837 = vlaneseq
  %v838 = vshrl.u32 %v837, 7
  %v839 = vsub.s32 0, %v838
  %v840 = vrot.slane %v835, %v839
  %v842 = vadd.f32 %v834, %v840
  %vm843 = vcmask 7168
  %844 = vst.msk [vmem:[%s11] sm:$0xff] %vm843, %v842
  // Predicated region
  $region46: #{q_forward.1} parent=0 // pred_check
    _
  $region47: #{q_forward.1} parent=0 // pred_check_branch
    %846 = sbr.rel (0) target = $region49
  $region48: #{q_forward.1} parent=0 // pred_region
    _
  $region49: #{q_forward.1} parent=0 // pred_fallthru
    _
  // Predicated region
  $region50: #{q_forward.1} parent=0 // pred_check
    _
  $region51: #{q_forward.1} parent=0 // pred_check_branch
    %848 = sbr.rel (0) target = $region53
  $region52: #{q_forward.1} parent=0 // pred_region
    _
  $region53: #{q_forward.1} parent=0 // pred_fallthru
    _

</llo_original>
